<compile_context>
chip_gen: v7x
topology: tpu7x:2x2x1
jax: 0.10.0
libtpu: 0.0.40
codegen_flags: <defaults>
</compile_context>

<pallas_src>
import functools

import jax
import jax.numpy as jnp
from jax import lax
from jax.experimental import pallas as pl
from jax.experimental.pallas import tpu as pltpu


_UNROLL_MAX_ITS = 8   # fully unroll the energy loop up to this many iterations
_WHILE_CHUNK = 4      # steps unrolled per while-loop body for large max_its


def pc_forward_kernel(
    x_ref, wf0_ref, bf0_ref, wf1_ref, bf1_ref,
    wres_ref, wgrad_ref, bres_ref, escale_ref, out_ref,
    *, max_its, min_energy, energy_lr, total_batch, use_bf16_mxu, feat_axis,
):
    f32 = jnp.float32
    mxu_dt = jnp.bfloat16 if use_bf16_mxu else f32
    fa = feat_axis                      # 0: (feat, batch) lane-dense; 1: (batch, feat)

    x = x_ref[...]
    wf0 = wf0_ref[...]; bf0 = bf0_ref[...]
    wf1 = wf1_ref[...]; bf1 = bf1_ref[...]
    wres = wres_ref[...]; wgrad = wgrad_ref[...]
    bres = bres_ref[...]

    D1, D0 = wf0.shape
    D2 = wf1.shape[0]
    Dsg = D1 + D2                       # [s1 ; s2]
    Dres = D0 + D1 + D2                 # [r_b0 ; r_b1 ; r_f1]

    # MSE "mean" normalizers use the FULL batch (matters when gridded over batch).
    n1 = float(total_batch * D1)
    n2 = float(total_batch * D2)
    lr = float(energy_lr)
    c1 = f32(2.0 * lr / n1)
    c2 = f32(2.0 * lr / n2)

    if fa == 0:
        def lin(s, w):                  # W @ S  (W: (out, in), S: (in, B)) -> (out, B)
            return lax.dot_general(w, s, (((1,), (0,)), ((), ())),
                                   preferred_element_type=f32)

        def fslice(a, lo, hi):
            return a[lo:hi, :]
    else:
        def lin(s, w):                  # S @ W^T  (S: (B, in), W: (out, in)) -> (B, out)
            return lax.dot_general(s, w, (((1,), (1,)), ((), ())),
                                   preferred_element_type=f32)

        def fslice(a, lo, hi):
            return a[:, lo:hi]

    def fcat(parts):
        return jnp.concatenate(parts, axis=fa)

    # ---- forward_state_init (one-time, f32 MXU: sets output magnitudes) ----
    pf0 = lin(x, wf0) + bf0             # f0(s0); constant across iterations
    s2_0 = lin(pf0, wf1) + bf1
    s_cat = fcat([pf0, s2_0])           # [s1 ; s2] along the feature axis

    # energy >= 0 always, so min_energy <= 0 can never trigger the break:
    # statically drop the whole energy/done machinery in that case.
    check_energy = float(min_energy) > 0.0
    if check_energy:
        inv_n1 = f32(1.0 / n1)
        escale = escale_ref[...]        # (Dres,1)/(1,Dres) row of 1/n block scales
        min_e = f32(min_energy)

        def energy_of(rg, r_f0):
            # four MSE terms folded into TWO cross-lane reductions
            return inv_n1 * jnp.sum(r_f0 * r_f0) + jnp.sum(rg * rg * escale)

    def step_terms(s_cat):
        s_m = s_cat.astype(mxu_dt)
        # residuals [b0(s1)-x ; b1(s2)-s1 ; f1(s1)-s2]: ONE block-sparse dot, and
        # the subtraction operand is exactly concat([x, s_cat]) by construction.
        rg = lin(s_m, wres) + bres - fcat([x, s_cat])
        r_f0 = pf0 - fslice(s_cat, 0, D1)                 # f0(s0) - s1 (no matmul)
        r_b1 = fslice(rg, D0, D0 + D1)
        r_f1 = fslice(rg, D0 + D1, Dres)
        # lr-scaled grads [g1 ; g2]: ONE block-sparse dot + identity-chain terms
        upd = (lin(rg.astype(mxu_dt), wgrad)
               - fcat([c1 * (r_f0 + r_b1), c2 * r_f1]))
        return rg, r_f0, upd

    if max_its <= _UNROLL_MAX_ITS:
        # Fully unrolled: flat instruction stream for the scheduler.
        done = None        # scalar f32 0/1 flag: "the torch break has fired"
        for it in range(max_its):
            rg, r_f0, upd = step_terms(s_cat)
            if done is None:
                s_cat = s_cat - upd
            else:
                s_cat = s_cat - (1.0 - done) * upd        # scalar-gated step
            # Torch breaks AFTER the step, so the break only gates *later*
            # iterations: the last iteration never needs the energy reduction.
            if check_energy and it + 1 < max_its:
                hit = (energy_of(rg, r_f0) < min_e).astype(f32)
                done = hit if done is None else jnp.maximum(done, hit)
    elif check_energy:
        # Large max_its with a live break: chunked while_loop (K unrolled,
        # scalar-gated steps) -> at most K-1 wasted gated steps at exit.
        n_chunks = (max_its + _WHILE_CHUNK - 1) // _WHILE_CHUNK

        def cond(carry):
            c, _, done = carry
            return jnp.logical_and(done == 0.0, c < n_chunks)

        def body(carry):
            c, s_cat, done = carry
            base = c * _WHILE_CHUNK
            for j in range(_WHILE_CHUNK):
                gate = jnp.where(
                    jnp.logical_and(done == 0.0, base + j < max_its),
                    f32(1.0), f32(0.0))
                rg, r_f0, upd = step_terms(s_cat)
                s_cat = s_cat - gate * upd
                hit = jnp.logical_and(gate > 0.0, energy_of(rg, r_f0) < min_e)
                done = jnp.maximum(done, hit.astype(f32))
            return c + 1, s_cat, done

        _, s_cat, _ = lax.while_loop(
            cond, body, (jnp.int32(0), s_cat, f32(0.0)))
    else:
        def body(i, s_cat):
            _, _, upd = step_terms(s_cat)
            return s_cat - upd

        s_cat = lax.fori_loop(0, max_its, body, s_cat)

    out_ref[...] = fslice(s_cat, D1, Dsg).astype(out_ref.dtype)


def _build_fused_weights(params, *, energy_lr, total_batch, mxu_dtype):
    """Wrapper-side (one-time) fusion of the per-iteration weights.

    Residual order is [r_b0(D0) ; r_b1(D1) ; r_f1(D2)] so its subtraction operand
    inside the kernel is exactly concat([x, s1, s2]) = concat([x, s_cat]).
    """
    wf0, bf0, wb0, bb0, wf1, bf1, wb1, bb1 = params
    D1, D0 = wf0.shape
    D2 = wf1.shape[0]
    B = total_batch
    n0, n1, n2 = float(B * D0), float(B * D1), float(B * D2)
    c0, c1, c2 = 2.0 * energy_lr / n0, 2.0 * energy_lr / n1, 2.0 * energy_lr / n2
    Dsg, Dres = D1 + D2, D0 + D1 + D2

    # Block-sparse residual matrix: [r_b0;r_b1;r_f1]_pred = lin([s1;s2], W_res)
    w_res = jnp.zeros((Dres, Dsg), jnp.float32)
    w_res = w_res.at[:D0, :D1].set(wb0)              # b0(s1)
    w_res = w_res.at[D0:D0 + D1, D1:].set(wb1)       # b1(s2)
    w_res = w_res.at[D0 + D1:, :D1].set(wf1)         # f1(s1)

    # Block-sparse gradient matrix with lr and 2/n scales folded in:
    # [g1_mm ; g2_mm] = lin([r_b0;r_b1;r_f1], W_grad)
    w_grad = jnp.zeros((Dsg, Dres), jnp.float32)
    w_grad = w_grad.at[:D1, :D0].set(c0 * wb0.T)            # (2lr/n0) r_b0 @ wb0
    w_grad = w_grad.at[:D1, D0 + D1:].set(c2 * wf1.T)       # (2lr/n2) r_f1 @ wf1
    w_grad = w_grad.at[D1:, D0:D0 + D1].set(c1 * wb1.T)     # (2lr/n1) r_b1 @ wb1

    bias_res = jnp.concatenate([bb0, bb1, bf1], axis=1)     # (1, Dres)
    e_scale = jnp.concatenate(
        [jnp.full((1, D0), 1.0 / n0, jnp.float32),
         jnp.full((1, D1), 1.0 / n1, jnp.float32),
         jnp.full((1, D2), 1.0 / n2, jnp.float32)], axis=1)  # (1, Dres)
    return w_res.astype(mxu_dtype), w_grad.astype(mxu_dtype), bias_res, e_scale


def pc_model_forward(x, params, *, max_its=3, min_energy=1e-6, energy_lr=0.01,
                     batch_block=None, use_bf16_mxu=True, batch_on_lanes=None):
    """Pallas forward pass of the 2-layer Linear PCModel.

    batch_on_lanes: lane-dense (feat, B) layout; defaults to True when B >= 128.
    batch_block: opt-in batch grid (intended for v7x megacore with exactly 2
      blocks); v5e/v6e should leave it None (single TensorCore -> grid serializes).
    """
    wf0, bf0, wb0, bb0, wf1, bf1, wb1, bb1 = params
    B, D0 = x.shape
    D1 = wf0.shape[0]
    D2 = wf1.shape[0]

    if batch_on_lanes is None:
        batch_on_lanes = B >= 128      # lane-dense once the batch fills 128 lanes
    mxu_dtype = jnp.bfloat16 if use_bf16_mxu else jnp.float32

    w_res, w_grad, bias_res, e_scale = _build_fused_weights(
        params, energy_lr=energy_lr, total_batch=B, mxu_dtype=mxu_dtype)

    blk_mult = 128 if batch_on_lanes else 8
    gridded = (batch_block is not None and batch_block % blk_mult == 0
               and B % batch_block == 0 and B // batch_block > 1)

    kern_min_energy = min_energy
    if gridded and min_energy > 0.0:
        # TODO(synk): the torch break uses the *global* batch-mean energy; per-block
        # energies cannot reproduce that decision, so the gridded path disables the
        # early break (exact whenever the break would not fire, e.g. tiny min_energy).
        kern_min_energy = -1.0

    fa = 0 if batch_on_lanes else 1
    if batch_on_lanes:
        x_in = x.T                                   # (D0, B)
        bf0_in, bf1_in = bf0.T, bf1.T                # (D1,1), (D2,1)
        bres_in, escale_in = bias_res.T, e_scale.T   # (Dres,1)
        out_kshape = (D2, B)
    else:
        x_in = x
        bf0_in, bf1_in = bf0, bf1
        bres_in, escale_in = bias_res, e_scale
        out_kshape = (B, D2)

    kernel = functools.partial(
        pc_forward_kernel, max_its=max_its, min_energy=kern_min_energy,
        energy_lr=energy_lr, total_batch=B, use_bf16_mxu=use_bf16_mxu,
        feat_axis=fa)

    args = (x_in, wf0, bf0_in, wf1, bf1_in, w_res, w_grad, bres_in, escale_in)
    out_shape = jax.ShapeDtypeStruct(out_kshape, jnp.float32)

    if not gridded:
        vmem = pl.BlockSpec(memory_space=pltpu.MemorySpace.VMEM)
        out = pl.pallas_call(
            kernel, out_shape=out_shape,
            in_specs=[vmem] * len(args), out_specs=vmem,
        )(*args)
    else:
        def full_spec(a):
            return pl.BlockSpec(a.shape, lambda i: (0, 0))   # weights stay resident

        if batch_on_lanes:
            x_spec = pl.BlockSpec((D0, batch_block), lambda i: (0, i))
            out_spec = pl.BlockSpec((D2, batch_block), lambda i: (0, i))
        else:
            x_spec = pl.BlockSpec((batch_block, D0), lambda i: (i, 0))
            out_spec = pl.BlockSpec((batch_block, D2), lambda i: (i, 0))
        in_specs = [x_spec] + [full_spec(a) for a in args[1:]]
        out = pl.pallas_call(
            kernel, out_shape=out_shape, grid=(B // batch_block,),
            in_specs=in_specs, out_specs=out_spec,
            compiler_params=pltpu.CompilerParams(
                dimension_semantics=("parallel",)),
        )(*args)

    return out.T if batch_on_lanes else out


# ---------------- pure-JAX reference (f32, same math, no Pallas) ----------------
def pc_model_forward_ref(x, params, *, max_its=3, min_energy=1e-6, energy_lr=0.01):
    wf0, bf0, wb0, bb0, wf1, bf1, wb1, bb1 = params
    B, D0 = x.shape
    D1, D2 = wf0.shape[0], wf1.shape[0]
    n0, n1, n2 = float(B * D0), float(B * D1), float(B * D2)

    def lin(v, w, b):
        return jnp.dot(v, w.T, precision=lax.Precision.HIGHEST) + b

    pf0 = lin(x, wf0, bf0)
    s1, s2 = pf0, lin(pf0, wf1, bf1)
    done = False
    for _ in range(max_its):
        if done:
            break
        r_f0 = pf0 - s1
        r_b0 = lin(s1, wb0, bb0) - x
        r_f1 = lin(s1, wf1, bf1) - s2
        r_b1 = lin(s2, wb1, bb1) - s1
        energy = (jnp.sum(r_f0**2) / n1 + jnp.sum(r_b0**2) / n0
                  + jnp.sum(r_f1**2) / n2 + jnp.sum(r_b1**2) / n1)
        g1 = ((-2.0 / n1) * r_f0 + (2.0 / n0) * r_b0 @ wb0
              + (2.0 / n2) * r_f1 @ wf1 + (-2.0 / n1) * r_b1)
        g2 = (-2.0 / n2) * r_f1 + (2.0 / n1) * r_b1 @ wb1
        s1 = s1 - energy_lr * g1
        s2 = s2 - energy_lr * g2
        done = bool(energy < min_energy)     # torch breaks after the step
    return s2


def init_linear(key, d_out, d_in):
    kw, kb = jax.random.split(key)
    bound = 1.0 / jnp.sqrt(jnp.float32(d_in))
    w = jax.random.uniform(kw, (d_out, d_in), jnp.float32, -bound, bound)
    b = jax.random.uniform(kb, (1, d_out), jnp.float32, -bound, bound)
    return w, b


if __name__ == "__main__":
    D0, D1, D2 = 32, 64, 16
    key = jax.random.PRNGKey(0)
    k_x, k_f0, k_b0, k_f1, k_b1, k_x2, k_x3 = jax.random.split(key, 7)

    wf0, bf0 = init_linear(k_f0, D1, D0)
    wb0, bb0 = init_linear(k_b0, D0, D1)
    wf1, bf1 = init_linear(k_f1, D2, D1)
    wb1, bb1 = init_linear(k_b1, D1, D2)
    params = (wf0, bf0, wb0, bb0, wf1, bf1, wb1, bb1)

    def check(x, *, max_its, min_energy, energy_lr=1.0, **kw):
        out = jax.block_until_ready(pc_model_forward(
            x, params, max_its=max_its, min_energy=min_energy,
            energy_lr=energy_lr, **kw))
        ref = pc_model_forward_ref(x, params, max_its=max_its,
                                   min_energy=min_energy, energy_lr=energy_lr)
        assert out.shape == ref.shape
        assert jnp.allclose(out, ref, atol=1e-3, rtol=1e-3), (
            f"mismatch vs reference: max|diff|="
            f"{float(jnp.max(jnp.abs(out - ref)))}")
        return out

    # 1) small batch, batch-major layout; break machinery live but never firing.
    x8 = jax.random.normal(k_x, (8, D0), jnp.float32)
    check(x8, max_its=3, min_energy=1e-6)

    # 2) early break fires after the first step (torch breaks AFTER the step).
    check(x8, max_its=3, min_energy=100.0)

    # 3) large max_its -> chunked lax.while_loop path with exact per-step gating.
    check(x8, max_its=10, min_energy=1e-6)

    # 4) lane-dense batch-on-lanes layout (B >= 128), single block, exact break.
    x128 = jax.random.normal(k_x2, (128, D0), jnp.float32)
    check(x128, max_its=3, min_energy=1e-6)

    # 5) v7x-style 2-block "parallel" batch grid (min_energy=0 -> break is a no-op,
    #    so the gridded path is exact); on v5e/v6e this just runs 2 serial steps.
    x256 = jax.random.normal(k_x3, (256, D0), jnp.float32)
    check(x256, max_its=3, min_energy=0.0, batch_block=128)

    print("KERNEL_OK")
</pallas_src>

<mosaic_0001>
module attributes {stable_mosaic.version = 11 : i64} {
  func.func @pc_forward_kernel(%arg0: memref<8x32xf32, #tpu.memory_space<vmem>>, %arg1: memref<64x32xf32, #tpu.memory_space<vmem>>, %arg2: memref<1x64xf32, #tpu.memory_space<vmem>>, %arg3: memref<16x64xf32, #tpu.memory_space<vmem>>, %arg4: memref<1x16xf32, #tpu.memory_space<vmem>>, %arg5: memref<112x80xbf16, #tpu.memory_space<vmem>>, %arg6: memref<80x112xbf16, #tpu.memory_space<vmem>>, %arg7: memref<1x112xf32, #tpu.memory_space<vmem>>, %arg8: memref<1x112xf32, #tpu.memory_space<vmem>>, %arg9: memref<8x16xf32, #tpu.memory_space<vmem>>) attributes {dimension_semantics = [], scalar_prefetch = 0 : i64, scratch_operands = 0 : i64, tpu.core_type = #tpu.core_type<tc>} {
    %c0 = arith.constant 0 : index
    %c0_0 = arith.constant 0 : index
    %0 = vector.load %arg0[%c0, %c0_0] : memref<8x32xf32, #tpu.memory_space<vmem>>, vector<8x32xf32>
    %c0_1 = arith.constant 0 : index
    %c0_2 = arith.constant 0 : index
    %1 = vector.load %arg1[%c0_1, %c0_2] : memref<64x32xf32, #tpu.memory_space<vmem>>, vector<64x32xf32>
    %c0_3 = arith.constant 0 : index
    %c0_4 = arith.constant 0 : index
    %2 = vector.load %arg2[%c0_3, %c0_4] : memref<1x64xf32, #tpu.memory_space<vmem>>, vector<1x64xf32>
    %c0_5 = arith.constant 0 : index
    %c0_6 = arith.constant 0 : index
    %3 = vector.load %arg3[%c0_5, %c0_6] : memref<16x64xf32, #tpu.memory_space<vmem>>, vector<16x64xf32>
    %c0_7 = arith.constant 0 : index
    %c0_8 = arith.constant 0 : index
    %4 = vector.load %arg4[%c0_7, %c0_8] : memref<1x16xf32, #tpu.memory_space<vmem>>, vector<1x16xf32>
    %c0_9 = arith.constant 0 : index
    %c0_10 = arith.constant 0 : index
    %5 = vector.load %arg5[%c0_9, %c0_10] : memref<112x80xbf16, #tpu.memory_space<vmem>>, vector<112x80xbf16>
    %c0_11 = arith.constant 0 : index
    %c0_12 = arith.constant 0 : index
    %6 = vector.load %arg6[%c0_11, %c0_12] : memref<80x112xbf16, #tpu.memory_space<vmem>>, vector<80x112xbf16>
    %c0_13 = arith.constant 0 : index
    %c0_14 = arith.constant 0 : index
    %7 = vector.load %arg7[%c0_13, %c0_14] : memref<1x112xf32, #tpu.memory_space<vmem>>, vector<1x112xf32>
    %cst = arith.constant dense<0.000000e+00> : vector<8x64xf32>
    %8 = tpu.matmul %0, %1, %cst {dimension_numbers = #tpu.dot_dimension_numbers<[1], [1], [0], [0], [0, 0, 1, 0], [], []>} : vector<8x32xf32>, vector<64x32xf32>, vector<8x64xf32> -> vector<8x64xf32>
    %9 = vector.broadcast %2 : vector<1x64xf32> to vector<8x64xf32>
    %10 = arith.addf %8, %9 : vector<8x64xf32>
    %cst_15 = arith.constant dense<0.000000e+00> : vector<8x16xf32>
    %11 = tpu.matmul %10, %3, %cst_15 {dimension_numbers = #tpu.dot_dimension_numbers<[1], [1], [0], [0], [0, 0, 1, 0], [], []>} : vector<8x64xf32>, vector<16x64xf32>, vector<8x16xf32> -> vector<8x16xf32>
    %12 = vector.broadcast %4 : vector<1x16xf32> to vector<8x16xf32>
    %13 = arith.addf %11, %12 : vector<8x16xf32>
    %14 = tpu.concatenate %10, %13 in 1 : vector<8x64xf32>, vector<8x16xf32> -> vector<8x80xf32>
    %c0_16 = arith.constant 0 : index
    %c0_17 = arith.constant 0 : index
    %15 = vector.load %arg8[%c0_16, %c0_17] : memref<1x112xf32, #tpu.memory_space<vmem>>, vector<1x112xf32>
    %16 = arith.truncf %14 : vector<8x80xf32> to vector<8x80xbf16>
    %cst_18 = arith.constant dense<0.000000e+00> : vector<8x112xf32>
    %17 = tpu.matmul %16, %5, %cst_18 {dimension_numbers = #tpu.dot_dimension_numbers<[1], [1], [0], [0], [0, 0, 1, 0], [], []>} : vector<8x80xbf16>, vector<112x80xbf16>, vector<8x112xf32> -> vector<8x112xf32>
    %18 = vector.broadcast %7 : vector<1x112xf32> to vector<8x112xf32>
    %19 = arith.addf %17, %18 : vector<8x112xf32>
    %20 = tpu.concatenate %0, %14 in 1 : vector<8x32xf32>, vector<8x80xf32> -> vector<8x112xf32>
    %21 = arith.subf %19, %20 : vector<8x112xf32>
    %22 = vector.extract_strided_slice %14 {offsets = [0, 0], sizes = [8, 64], strides = [1, 1]} : vector<8x80xf32> to vector<8x64xf32>
    %23 = arith.subf %10, %22 : vector<8x64xf32>
    %24 = vector.extract_strided_slice %21 {offsets = [0, 32], sizes = [8, 64], strides = [1, 1]} : vector<8x112xf32> to vector<8x64xf32>
    %25 = vector.extract_strided_slice %21 {offsets = [0, 96], sizes = [8, 16], strides = [1, 1]} : vector<8x112xf32> to vector<8x16xf32>
    %26 = arith.truncf %21 : vector<8x112xf32> to vector<8x112xbf16>
    %cst_19 = arith.constant dense<0.000000e+00> : vector<8x80xf32>
    %27 = tpu.matmul %26, %6, %cst_19 {dimension_numbers = #tpu.dot_dimension_numbers<[1], [1], [0], [0], [0, 0, 1, 0], [], []>} : vector<8x112xbf16>, vector<80x112xbf16>, vector<8x80xf32> -> vector<8x80xf32>
    %28 = arith.addf %23, %24 : vector<8x64xf32>
    %cst_20 = arith.constant 3.906250e-03 : f32
    %29 = vector.broadcast %cst_20 : f32 to vector<8x64xf32>
    %30 = arith.mulf %29, %28 : vector<8x64xf32>
    %cst_21 = arith.constant 1.562500e-02 : f32
    %31 = vector.broadcast %cst_21 : f32 to vector<8x16xf32>
    %32 = arith.mulf %31, %25 : vector<8x16xf32>
    %33 = tpu.concatenate %30, %32 in 1 : vector<8x64xf32>, vector<8x16xf32> -> vector<8x80xf32>
    %34 = arith.subf %27, %33 : vector<8x80xf32>
    %35 = arith.subf %14, %34 : vector<8x80xf32>
    %36 = arith.mulf %23, %23 : vector<8x64xf32>
    %37 = vector.shape_cast %36 : vector<8x64xf32> to vector<1x8x64xf32>
    %cst_22 = arith.constant dense<0.000000e+00> : vector<1xf32>
    %38 = vector.multi_reduction <add>, %37, %cst_22 [1, 2] : vector<1x8x64xf32> to vector<1xf32>
    %39 = vector.shape_cast %38 : vector<1xf32> to vector<1x1x1xf32>
    %40 = vector.extract %39[0, 0, 0] : f32 from vector<1x1x1xf32>
    %cst_23 = arith.constant 0.001953125 : f32
    %41 = arith.mulf %cst_23, %40 : f32
    %42 = arith.mulf %21, %21 : vector<8x112xf32>
    %43 = vector.broadcast %15 : vector<1x112xf32> to vector<8x112xf32>
    %44 = arith.mulf %42, %43 : vector<8x112xf32>
    %45 = vector.shape_cast %44 : vector<8x112xf32> to vector<1x8x112xf32>
    %cst_24 = arith.constant dense<0.000000e+00> : vector<1xf32>
    %46 = vector.multi_reduction <add>, %45, %cst_24 [1, 2] : vector<1x8x112xf32> to vector<1xf32>
    %47 = vector.shape_cast %46 : vector<1xf32> to vector<1x1x1xf32>
    %48 = vector.extract %47[0, 0, 0] : f32 from vector<1x1x1xf32>
    %49 = arith.addf %41, %48 : f32
    %cst_25 = arith.constant 9.99999997E-7 : f32
    %50 = arith.cmpf olt, %49, %cst_25 : f32
    %51 = arith.extui %50 : i1 to i32
    %52 = arith.sitofp %51 : i32 to f32
    %53 = arith.truncf %35 : vector<8x80xf32> to vector<8x80xbf16>
    %cst_26 = arith.constant dense<0.000000e+00> : vector<8x112xf32>
    %54 = tpu.matmul %53, %5, %cst_26 {dimension_numbers = #tpu.dot_dimension_numbers<[1], [1], [0], [0], [0, 0, 1, 0], [], []>} : vector<8x80xbf16>, vector<112x80xbf16>, vector<8x112xf32> -> vector<8x112xf32>
    %55 = vector.broadcast %7 : vector<1x112xf32> to vector<8x112xf32>
    %56 = arith.addf %54, %55 : vector<8x112xf32>
    %57 = tpu.concatenate %0, %35 in 1 : vector<8x32xf32>, vector<8x80xf32> -> vector<8x112xf32>
    %58 = arith.subf %56, %57 : vector<8x112xf32>
    %59 = vector.extract_strided_slice %35 {offsets = [0, 0], sizes = [8, 64], strides = [1, 1]} : vector<8x80xf32> to vector<8x64xf32>
    %60 = arith.subf %10, %59 : vector<8x64xf32>
    %61 = vector.extract_strided_slice %58 {offsets = [0, 32], sizes = [8, 64], strides = [1, 1]} : vector<8x112xf32> to vector<8x64xf32>
    %62 = vector.extract_strided_slice %58 {offsets = [0, 96], sizes = [8, 16], strides = [1, 1]} : vector<8x112xf32> to vector<8x16xf32>
    %63 = arith.truncf %58 : vector<8x112xf32> to vector<8x112xbf16>
    %cst_27 = arith.constant dense<0.000000e+00> : vector<8x80xf32>
    %64 = tpu.matmul %63, %6, %cst_27 {dimension_numbers = #tpu.dot_dimension_numbers<[1], [1], [0], [0], [0, 0, 1, 0], [], []>} : vector<8x112xbf16>, vector<80x112xbf16>, vector<8x80xf32> -> vector<8x80xf32>
    %65 = arith.addf %60, %61 : vector<8x64xf32>
    %cst_28 = arith.constant 3.906250e-03 : f32
    %66 = vector.broadcast %cst_28 : f32 to vector<8x64xf32>
    %67 = arith.mulf %66, %65 : vector<8x64xf32>
    %cst_29 = arith.constant 1.562500e-02 : f32
    %68 = vector.broadcast %cst_29 : f32 to vector<8x16xf32>
    %69 = arith.mulf %68, %62 : vector<8x16xf32>
    %70 = tpu.concatenate %67, %69 in 1 : vector<8x64xf32>, vector<8x16xf32> -> vector<8x80xf32>
    %71 = arith.subf %64, %70 : vector<8x80xf32>
    %cst_30 = arith.constant 1.000000e+00 : f32
    %72 = arith.subf %cst_30, %52 : f32
    %73 = vector.broadcast %72 : f32 to vector<8x80xf32>
    %74 = arith.mulf %73, %71 : vector<8x80xf32>
    %75 = arith.subf %35, %74 : vector<8x80xf32>
    %76 = arith.mulf %60, %60 : vector<8x64xf32>
    %77 = vector.shape_cast %76 : vector<8x64xf32> to vector<1x8x64xf32>
    %cst_31 = arith.constant dense<0.000000e+00> : vector<1xf32>
    %78 = vector.multi_reduction <add>, %77, %cst_31 [1, 2] : vector<1x8x64xf32> to vector<1xf32>
    %79 = vector.shape_cast %78 : vector<1xf32> to vector<1x1x1xf32>
    %80 = vector.extract %79[0, 0, 0] : f32 from vector<1x1x1xf32>
    %cst_32 = arith.constant 0.001953125 : f32
    %81 = arith.mulf %cst_32, %80 : f32
    %82 = arith.mulf %58, %58 : vector<8x112xf32>
    %83 = vector.broadcast %15 : vector<1x112xf32> to vector<8x112xf32>
    %84 = arith.mulf %82, %83 : vector<8x112xf32>
    %85 = vector.shape_cast %84 : vector<8x112xf32> to vector<1x8x112xf32>
    %cst_33 = arith.constant dense<0.000000e+00> : vector<1xf32>
    %86 = vector.multi_reduction <add>, %85, %cst_33 [1, 2] : vector<1x8x112xf32> to vector<1xf32>
    %87 = vector.shape_cast %86 : vector<1xf32> to vector<1x1x1xf32>
    %88 = vector.extract %87[0, 0, 0] : f32 from vector<1x1x1xf32>
    %89 = arith.addf %81, %88 : f32
    %cst_34 = arith.constant 9.99999997E-7 : f32
    %90 = arith.cmpf olt, %89, %cst_34 : f32
    %91 = arith.extui %90 : i1 to i32
    %92 = arith.sitofp %91 : i32 to f32
    %93 = arith.maximumf %52, %92 : f32
    %94 = arith.truncf %75 : vector<8x80xf32> to vector<8x80xbf16>
    %cst_35 = arith.constant dense<0.000000e+00> : vector<8x112xf32>
    %95 = tpu.matmul %94, %5, %cst_35 {dimension_numbers = #tpu.dot_dimension_numbers<[1], [1], [0], [0], [0, 0, 1, 0], [], []>} : vector<8x80xbf16>, vector<112x80xbf16>, vector<8x112xf32> -> vector<8x112xf32>
    %96 = vector.broadcast %7 : vector<1x112xf32> to vector<8x112xf32>
    %97 = arith.addf %95, %96 : vector<8x112xf32>
    %98 = tpu.concatenate %0, %75 in 1 : vector<8x32xf32>, vector<8x80xf32> -> vector<8x112xf32>
    %99 = arith.subf %97, %98 : vector<8x112xf32>
    %100 = vector.extract_strided_slice %75 {offsets = [0, 0], sizes = [8, 64], strides = [1, 1]} : vector<8x80xf32> to vector<8x64xf32>
    %101 = arith.subf %10, %100 : vector<8x64xf32>
    %102 = vector.extract_strided_slice %99 {offsets = [0, 32], sizes = [8, 64], strides = [1, 1]} : vector<8x112xf32> to vector<8x64xf32>
    %103 = vector.extract_strided_slice %99 {offsets = [0, 96], sizes = [8, 16], strides = [1, 1]} : vector<8x112xf32> to vector<8x16xf32>
    %104 = arith.truncf %99 : vector<8x112xf32> to vector<8x112xbf16>
    %cst_36 = arith.constant dense<0.000000e+00> : vector<8x80xf32>
    %105 = tpu.matmul %104, %6, %cst_36 {dimension_numbers = #tpu.dot_dimension_numbers<[1], [1], [0], [0], [0, 0, 1, 0], [], []>} : vector<8x112xbf16>, vector<80x112xbf16>, vector<8x80xf32> -> vector<8x80xf32>
    %106 = arith.addf %101, %102 : vector<8x64xf32>
    %cst_37 = arith.constant 3.906250e-03 : f32
    %107 = vector.broadcast %cst_37 : f32 to vector<8x64xf32>
    %108 = arith.mulf %107, %106 : vector<8x64xf32>
    %cst_38 = arith.constant 1.562500e-02 : f32
    %109 = vector.broadcast %cst_38 : f32 to vector<8x16xf32>
    %110 = arith.mulf %109, %103 : vector<8x16xf32>
    %111 = tpu.concatenate %108, %110 in 1 : vector<8x64xf32>, vector<8x16xf32> -> vector<8x80xf32>
    %112 = arith.subf %105, %111 : vector<8x80xf32>
    %cst_39 = arith.constant 1.000000e+00 : f32
    %113 = arith.subf %cst_39, %93 : f32
    %114 = vector.broadcast %113 : f32 to vector<8x80xf32>
    %115 = arith.mulf %114, %112 : vector<8x80xf32>
    %116 = arith.subf %75, %115 : vector<8x80xf32>
    %117 = vector.extract_strided_slice %116 {offsets = [0, 64], sizes = [8, 16], strides = [1, 1]} : vector<8x80xf32> to vector<8x16xf32>
    %c0_40 = arith.constant 0 : index
    %c0_41 = arith.constant 0 : index
    %118 = vector.load %arg9[%c0_40, %c0_41] : memref<8x16xf32, #tpu.memory_space<vmem>>, vector<8x16xf32>
    tpu.vector_store %arg9[%c0_40, %c0_41], %117 {strides = array<i32>} : memref<8x16xf32, #tpu.memory_space<vmem>>, vector<8x16xf32>,
    return
  }
}

</mosaic_0001>

<llo_original>
// kernel: tpu_custom_call.1
$region0: #{tpu_custom_call.1}
  #allocation0 [shape = 'u32[]', space=smem, size = 0x4, offset = 0x4, fixed_abs, tag = 'smem constant byte address 0x4 - core index']
  #allocation1 [shape = 'u32[144,128]{1,0:T(1,128)}', space=vmem, size = 0x12000, scoped, tag = 'internal scratch']
  %s0 = inlined_call_operand.vmem [shape: f32[8,32], index: 0, kind: input, shape index: {}]
  %s1 = inlined_call_operand.vmem [shape: f32[64,32], index: 1, kind: input, shape index: {}]
  %s2 = inlined_call_operand.vmem [shape: f32[1,64], index: 2, kind: input, shape index: {}]
  %s3 = inlined_call_operand.vmem [shape: f32[16,64], index: 3, kind: input, shape index: {}]
  %s4 = inlined_call_operand.vmem [shape: f32[1,16], index: 4, kind: input, shape index: {}]
  %s5 = inlined_call_operand.vmem [shape: bf16[112,80], index: 5, kind: input, shape index: {}]
  %s6 = inlined_call_operand.vmem [shape: bf16[80,112], index: 6, kind: input, shape index: {}]
  %s7 = inlined_call_operand.vmem [shape: f32[1,112], index: 7, kind: input, shape index: {}]
  %s8 = inlined_call_operand.vmem [shape: f32[1,112], index: 8, kind: input, shape index: {}]
  %s9 = inlined_call_operand.hbm [shape: f32[8,16], index: 9, kind: output, shape index: {}]
  %s10 = sld [smem:[#allocation0]]
  $region46: #{tpu_custom_call.1} parent=0
    _
  %s12 = ssub.s32 1, %s10
  %s13 = scalar_select 0, %s12, %s10
  $region1: #{tpu_custom_call.1} parent=0
    #allocation2 [shape = 'u8[4096]{0}', space=vmem, size = 0x1000, scoped, tag = 'output window, operand 0, single buffered']
    #allocation3 [shape = 's32[1]{0}', space=sflag, size = 0x4, scoped, tag = 'scoped memory for tpu_custom_call.1']
    %14 = vsyncpa [#allocation3], 0
    // Predicated region
    $region2: #{tpu_custom_call.1} parent=1 // pred_check
      _
    $region3: #{tpu_custom_call.1} parent=1 // pred_check_branch
      %16 = sbr.rel (0) target = $region5
    $region4: #{tpu_custom_call.1} parent=1 // pred_region
      _
    $region5: #{tpu_custom_call.1} parent=1 // pred_fallthru
      _
    // Predicated region
    $region6: #{tpu_custom_call.1} parent=1 // pred_check
      _
    $region7: #{tpu_custom_call.1} parent=1 // pred_check_branch
      %18 = sbr.rel (0) target = $region9
    $region8: #{tpu_custom_call.1} parent=1 // pred_region
      _
    $region9: #{tpu_custom_call.1} parent=1 // pred_fallthru
      _
    // Predicated region
    $region10: #{tpu_custom_call.1} parent=1 // pred_check
      _
    $region11: #{tpu_custom_call.1} parent=1 // pred_check_branch
      %20 = sbr.rel (0) target = $region13
    $region12: #{tpu_custom_call.1} parent=1 // pred_region
      _
    $region13: #{tpu_custom_call.1} parent=1 // pred_fallthru
      _
    // Predicated region
    $region14: #{tpu_custom_call.1} parent=1 // pred_check
      _
    $region15: #{tpu_custom_call.1} parent=1 // pred_check_branch
      %22 = sbr.rel (0) target = $region17
    $region16: #{tpu_custom_call.1} parent=1 // pred_region
      _
    $region17: #{tpu_custom_call.1} parent=1 // pred_fallthru
      _
    // Predicated region
    $region18: #{tpu_custom_call.1} parent=1 // pred_check
      _
    $region19: #{tpu_custom_call.1} parent=1 // pred_check_branch
      %24 = sbr.rel (0) target = $region21
    $region20: #{tpu_custom_call.1} parent=1 // pred_region
      _
    $region21: #{tpu_custom_call.1} parent=1 // pred_fallthru
      _
    // Predicated region
    $region22: #{tpu_custom_call.1} parent=1 // pred_check
      _
    $region23: #{tpu_custom_call.1} parent=1 // pred_check_branch
      %26 = sbr.rel (0) target = $region25
    $region24: #{tpu_custom_call.1} parent=1 // pred_region
      _
    $region25: #{tpu_custom_call.1} parent=1 // pred_fallthru
      _
    // Predicated region
    $region26: #{tpu_custom_call.1} parent=1 // pred_check
      _
    $region27: #{tpu_custom_call.1} parent=1 // pred_check_branch
      %28 = sbr.rel (0) target = $region29
    $region28: #{tpu_custom_call.1} parent=1 // pred_region
      _
    $region29: #{tpu_custom_call.1} parent=1 // pred_fallthru
      _
    // Predicated region
    $region30: #{tpu_custom_call.1} parent=1 // pred_check
      _
    $region31: #{tpu_custom_call.1} parent=1 // pred_check_branch
      %30 = sbr.rel (0) target = $region33
    $region32: #{tpu_custom_call.1} parent=1 // pred_region
      _
    $region33: #{tpu_custom_call.1} parent=1 // pred_fallthru
      _
    // Predicated region
    $region34: #{tpu_custom_call.1} parent=1 // pred_check
      _
    $region35: #{tpu_custom_call.1} parent=1 // pred_check_branch
      %32 = sbr.rel (0) target = $region37
    $region36: #{tpu_custom_call.1} parent=1 // pred_region
      _
    $region37: #{tpu_custom_call.1} parent=1 // pred_fallthru
      _
    %v34 = vld [vmem:[%s0] sm:$0xff]
    %v35 = vld [vmem:[%s1] sm:$0xff]
    %v36 = vld [vmem:[%s1 + $0x8] sm:$0xff]
    %v37 = vld [vmem:[%s1 + $0x10] sm:$0xff]
    %v38 = vld [vmem:[%s1 + $0x18] sm:$0xff]
    %v39 = vld [vmem:[%s1 + $0x20] sm:$0xff]
    %v40 = vld [vmem:[%s1 + $0x28] sm:$0xff]
    %v41 = vld [vmem:[%s1 + $0x30] sm:$0xff]
    %v42 = vld [vmem:[%s1 + $0x38] sm:$0xff]
    %v43 = vld [vmem:[%s2] sm:$0x1]
    %v44 = vld [vmem:[%s3] sm:$0xff]
    %v45 = vld [vmem:[%s3 + $0x8] sm:$0xff]
    %v46 = vld [vmem:[%s4] sm:$0x1]
    %v47 = vld [vmem:[%s5] sm:$0xf]
    %v48 = vld [vmem:[%s5 + $0x4] sm:$0xf]
    %v49 = vld [vmem:[%s5 + $0x8] sm:$0xf]
    %v50 = vld [vmem:[%s5 + $0xc] sm:$0xf]
    %v51 = vld [vmem:[%s5 + $0x10] sm:$0xf]
    %v52 = vld [vmem:[%s5 + $0x14] sm:$0xf]
    %v53 = vld [vmem:[%s5 + $0x18] sm:$0xf]
    %v54 = vld [vmem:[%s5 + $0x1c] sm:$0xf]
    %v55 = vld [vmem:[%s5 + $0x20] sm:$0xf]
    %v56 = vld [vmem:[%s5 + $0x24] sm:$0xf]
    %v57 = vld [vmem:[%s5 + $0x28] sm:$0xf]
    %v58 = vld [vmem:[%s5 + $0x2c] sm:$0xf]
    %v59 = vld [vmem:[%s5 + $0x30] sm:$0xf]
    %v60 = vld [vmem:[%s5 + $0x34] sm:$0xf]
    %v61 = vld [vmem:[%s6] sm:$0xf]
    %v62 = vld [vmem:[%s6 + $0x4] sm:$0xf]
    %v63 = vld [vmem:[%s6 + $0x8] sm:$0xf]
    %v64 = vld [vmem:[%s6 + $0xc] sm:$0xf]
    %v65 = vld [vmem:[%s6 + $0x10] sm:$0xf]
    %v66 = vld [vmem:[%s6 + $0x14] sm:$0xf]
    %v67 = vld [vmem:[%s6 + $0x18] sm:$0xf]
    %v68 = vld [vmem:[%s6 + $0x1c] sm:$0xf]
    %v69 = vld [vmem:[%s6 + $0x20] sm:$0xf]
    %v70 = vld [vmem:[%s6 + $0x24] sm:$0xf]
    %v71 = vld [vmem:[%s7] sm:$0x1]
    %v73 = vlaneseq
    %v74 = vshrl.u32 %v73, 7
    %v75 = vsub.s32 0, %v74
    %v76 = vrot.slane %v43, %v75
    %vm78 = vcmask 261120
    %v80 = vsel %vm78, %v34, 0
    %v83 = vsel %vm78, %v35, 0
    %v86 = vsel %vm78, %v36, 0
    %v89 = vsel %vm78, %v37, 0
    %v92 = vsel %vm78, %v38, 0
    %v95 = vsel %vm78, %v39, 0
    %v98 = vsel %vm78, %v40, 0
    %v101 = vsel %vm78, %v41, 0
    %v104 = vsel %vm78, %v42, 0
    %106 = vmatprep.subr.mxu0 0.0
    %107 = vmatpush1.xpose.msra.mxu0 %v83
    %108 = vmatprep.subr.mxu0 0.0
    %109 = vmatpush1.xpose.msra.mxu0 %v86
    %110 = vmatprep.subr.mxu0 0.0
    %111 = vmatpush1.xpose.msra.mxu0 %v89
    %112 = vmatprep.subr.mxu0 0.0
    %113 = vmatpush1.xpose.msra.mxu0 %v92
    %114 = vmatprep.subr.mxu0 0.0
    %115 = vmatpush1.xpose.msra.mxu0 %v95
    %116 = vmatprep.subr.mxu0 0.0
    %117 = vmatpush1.xpose.msra.mxu0 %v98
    %118 = vmatprep.subr.mxu0 0.0
    %119 = vmatpush1.xpose.msra.mxu0 %v101
    %120 = vmatprep.subr.mxu0 0.0
    %121 = vmatpush1.xpose.msra.mxu0 %v104
    %122 = vmatprep.subr.mxu0 0.0
    %123 = vmatpush1.xpose.msra.mxu0 0.0
    %124 = vmatprep.subr.mxu0 0.0
    %125 = vmatpush1.xpose.msra.mxu0 0.0
    %126 = vmatprep.subr.mxu0 0.0
    %127 = vmatpush1.xpose.msra.mxu0 0.0
    %128 = vmatprep.subr.mxu0 0.0
    %129 = vmatpush1.xpose.msra.mxu0 0.0
    %130 = vmatprep.subr.mxu0 0.0
    %131 = vmatpush1.xpose.msra.mxu0 0.0
    %132 = vmatprep.subr.mxu0 0.0
    %133 = vmatpush1.xpose.msra.mxu0 0.0
    %134 = vmatprep.subr.mxu0 0.0
    %135 = vmatpush1.xpose.msra.mxu0 0.0
    %136 = vmatprep.subr.mxu0 0.0
    %137 = vmatpush1.xpose.msra.mxu0 0.0
    %138 = vmatprep.subr.mxu0 0.0
    %139 = vmatpush1.xpose.msra.mxu0 0.0
    %140 = vmatprep.subr.mxu0 0.0
    %141 = vmatpush1.xpose.msra.mxu0 0.0
    %142 = vmatprep.subr.mxu0 0.0
    %143 = vmatpush1.xpose.msra.mxu0 0.0
    %144 = vmatprep.subr.mxu0 0.0
    %145 = vmatpush1.xpose.msra.mxu0 0.0
    %146 = vmatprep.subr.mxu0 0.0
    %147 = vmatpush1.xpose.msra.mxu0 0.0
    %148 = vmatprep.subr.mxu0 0.0
    %149 = vmatpush1.xpose.msra.mxu0 0.0
    %150 = vmatprep.subr.mxu0 0.0
    %151 = vmatpush1.xpose.msra.mxu0 0.0
    %152 = vmatprep.subr.mxu0 0.0
    %153 = vmatpush1.xpose.msra.mxu0 0.0
    %154 = vmatprep.subr.mxu0 0.0
    %155 = vmatpush1.xpose.msra.mxu0 0.0
    %156 = vmatprep.subr.mxu0 0.0
    %157 = vmatpush1.xpose.msra.mxu0 0.0
    %158 = vmatprep.subr.mxu0 0.0
    %159 = vmatpush1.xpose.msra.mxu0 0.0
    %160 = vmatprep.subr.mxu0 0.0
    %161 = vmatpush1.xpose.msra.mxu0 0.0
    %162 = vmatprep.subr.mxu0 0.0
    %163 = vmatpush1.xpose.msra.mxu0 0.0
    %164 = vmatprep.subr.mxu0 0.0
    %165 = vmatpush1.xpose.msra.mxu0 0.0
    %166 = vmatprep.subr.mxu0 0.0
    %167 = vmatpush1.xpose.msra.mxu0 0.0
    %168 = vmatprep.subr.mxu0 0.0
    %169 = vmatpush1.xpose.msra.mxu0 0.0
    %170 = vmatprep.mubr.f32.mxu0 0.0
    %171 = vmatmul.mubr.f32.gmra.mrb[0].mxu0 %v80
    %v172 = vpop.f32.mrb[0].mxu0
    %v173 = vadd.f32 %v76, %v172
    %v174 = vpop.f32.mrb[0].mxu0
    %175 = vdwg.mxu0
    %v177 = vlaneseq
    %v178 = vshrl.u32 %v177, 7
    %v179 = vsub.s32 0, %v178
    %v180 = vrot.slane %v46, %v179
    %vm182 = vcmask 523264
    %v184 = vsel %vm182, %v173, 0
    %v187 = vsel %vm182, %v44, 0
    %v190 = vsel %vm182, %v45, 0
    %192 = vmatprep.subr.mxu0 0.0
    %193 = vmatpush1.xpose.msra.mxu0 %v187
    %194 = vmatprep.subr.mxu0 0.0
    %195 = vmatpush1.xpose.msra.mxu0 %v190
    %196 = vmatprep.subr.mxu0 0.0
    %197 = vmatpush1.xpose.msra.mxu0 0.0
    %198 = vmatprep.subr.mxu0 0.0
    %199 = vmatpush1.xpose.msra.mxu0 0.0
    %200 = vmatprep.subr.mxu0 0.0
    %201 = vmatpush1.xpose.msra.mxu0 0.0
    %202 = vmatprep.subr.mxu0 0.0
    %203 = vmatpush1.xpose.msra.mxu0 0.0
    %204 = vmatprep.subr.mxu0 0.0
    %205 = vmatpush1.xpose.msra.mxu0 0.0
    %206 = vmatprep.subr.mxu0 0.0
    %207 = vmatpush1.xpose.msra.mxu0 0.0
    %208 = vmatprep.subr.mxu0 0.0
    %209 = vmatpush1.xpose.msra.mxu0 0.0
    %210 = vmatprep.subr.mxu0 0.0
    %211 = vmatpush1.xpose.msra.mxu0 0.0
    %212 = vmatprep.subr.mxu0 0.0
    %213 = vmatpush1.xpose.msra.mxu0 0.0
    %214 = vmatprep.subr.mxu0 0.0
    %215 = vmatpush1.xpose.msra.mxu0 0.0
    %216 = vmatprep.subr.mxu0 0.0
    %217 = vmatpush1.xpose.msra.mxu0 0.0
    %218 = vmatprep.subr.mxu0 0.0
    %219 = vmatpush1.xpose.msra.mxu0 0.0
    %220 = vmatprep.subr.mxu0 0.0
    %221 = vmatpush1.xpose.msra.mxu0 0.0
    %222 = vmatprep.subr.mxu0 0.0
    %223 = vmatpush1.xpose.msra.mxu0 0.0
    %224 = vmatprep.subr.mxu0 0.0
    %225 = vmatpush1.xpose.msra.mxu0 0.0
    %226 = vmatprep.subr.mxu0 0.0
    %227 = vmatpush1.xpose.msra.mxu0 0.0
    %228 = vmatprep.subr.mxu0 0.0
    %229 = vmatpush1.xpose.msra.mxu0 0.0
    %230 = vmatprep.subr.mxu0 0.0
    %231 = vmatpush1.xpose.msra.mxu0 0.0
    %232 = vmatprep.subr.mxu0 0.0
    %233 = vmatpush1.xpose.msra.mxu0 0.0
    %234 = vmatprep.subr.mxu0 0.0
    %235 = vmatpush1.xpose.msra.mxu0 0.0
    %236 = vmatprep.subr.mxu0 0.0
    %237 = vmatpush1.xpose.msra.mxu0 0.0
    %238 = vmatprep.subr.mxu0 0.0
    %239 = vmatpush1.xpose.msra.mxu0 0.0
    %240 = vmatprep.subr.mxu0 0.0
    %241 = vmatpush1.xpose.msra.mxu0 0.0
    %242 = vmatprep.subr.mxu0 0.0
    %243 = vmatpush1.xpose.msra.mxu0 0.0
    %244 = vmatprep.subr.mxu0 0.0
    %245 = vmatpush1.xpose.msra.mxu0 0.0
    %246 = vmatprep.subr.mxu0 0.0
    %247 = vmatpush1.xpose.msra.mxu0 0.0
    %248 = vmatprep.subr.mxu0 0.0
    %249 = vmatpush1.xpose.msra.mxu0 0.0
    %250 = vmatprep.subr.mxu0 0.0
    %251 = vmatpush1.xpose.msra.mxu0 0.0
    %252 = vmatprep.subr.mxu0 0.0
    %253 = vmatpush1.xpose.msra.mxu0 0.0
    %254 = vmatprep.subr.mxu0 0.0
    %255 = vmatpush1.xpose.msra.mxu0 0.0
    %256 = vmatprep.mubr.f32.mxu0 0.0
    %257 = vmatmul.mubr.f32.gmra.mrb[0].mxu0 %v184
    %v258 = vpop.f32.mrb[0].mxu0
    %v259 = vadd.f32 %v180, %v258
    %v260 = vpop.f32.mrb[0].mxu0
    %261 = vdwg.mxu0
    %263 = vrot.lane.b32.xlu0 %v259, 64
    %v264 = vpop.permute.xlu0 %263
    %v266 = vsel %vm182, %v173, %v264
    %v267 = vld [vmem:[%s8] sm:$0x1]
    %v268 = vpack.c.bf16 %v266, %v266
    %v270 = vlaneseq
    %v271 = vshrl.u32 %v270, 7
    %v272 = vsub.s32 0, %v271
    %v273 = vrot.slane %v71, %v272
    %v289 = vunpack.c.l.b16 %v47
    %v290 = vunpack.c.l.b16 %v48
    %v291 = vunpack.c.l.b16 %v49
    %v292 = vunpack.c.l.b16 %v50
    %v293 = vunpack.c.l.b16 %v51
    %v294 = vunpack.c.l.b16 %v52
    %v295 = vunpack.c.l.b16 %v53
    %v296 = vunpack.c.l.b16 %v54
    %v297 = vunpack.c.l.b16 %v55
    %v298 = vunpack.c.l.b16 %v56
    %v299 = vunpack.c.l.b16 %v57
    %v300 = vunpack.c.l.b16 %v58
    %v301 = vunpack.c.l.b16 %v59
    %v302 = vunpack.c.l.b16 %v60
    %v303 = vpack.c.b16 %v290, %v289
    %v304 = vpack.c.b16 %v292, %v291
    %v305 = vpack.c.b16 %v294, %v293
    %v306 = vpack.c.b16 %v296, %v295
    %v307 = vpack.c.b16 %v298, %v297
    %v308 = vpack.c.b16 %v300, %v299
    %v309 = vpack.c.b16 %v302, %v301
    %vm310 = vcmask 654336
    %v312 = vsel %vm310, %v268, 0
    %v315 = vsel %vm310, %v303, 0
    %v318 = vsel %vm310, %v304, 0
    %v321 = vsel %vm310, %v305, 0
    %v324 = vsel %vm310, %v306, 0
    %v327 = vsel %vm310, %v307, 0
    %v330 = vsel %vm310, %v308, 0
    %v333 = vsel %vm310, %v309, 0
    %335 = vmatprep.subr.bf16.mxu0 0
    %336 = vmatpush1.bf16.xpose.msra.mxu0 %v315
    %337 = vmatprep.subr.bf16.mxu0 0
    %338 = vmatpush1.bf16.xpose.msra.mxu0 %v318
    %339 = vmatprep.subr.bf16.mxu0 0
    %340 = vmatpush1.bf16.xpose.msra.mxu0 %v321
    %341 = vmatprep.subr.bf16.mxu0 0
    %342 = vmatpush1.bf16.xpose.msra.mxu0 %v324
    %343 = vmatprep.subr.bf16.mxu0 0
    %344 = vmatpush1.bf16.xpose.msra.mxu0 %v327
    %345 = vmatprep.subr.bf16.mxu0 0
    %346 = vmatpush1.bf16.xpose.msra.mxu0 %v330
    %347 = vmatprep.subr.bf16.mxu0 0
    %348 = vmatpush1.bf16.xpose.msra.mxu0 %v333
    %349 = vmatprep.subr.bf16.mxu0 0
    %350 = vmatpush1.bf16.xpose.msra.mxu0 0
    %351 = vmatprep.subr.bf16.mxu0 0
    %352 = vmatpush1.bf16.xpose.msra.mxu0 0
    %353 = vmatprep.subr.bf16.mxu0 0
    %354 = vmatpush1.bf16.xpose.msra.mxu0 0
    %355 = vmatprep.subr.bf16.mxu0 0
    %356 = vmatpush1.bf16.xpose.msra.mxu0 0
    %357 = vmatprep.subr.bf16.mxu0 0
    %358 = vmatpush1.bf16.xpose.msra.mxu0 0
    %359 = vmatprep.subr.bf16.mxu0 0
    %360 = vmatpush1.bf16.xpose.msra.mxu0 0
    %361 = vmatprep.subr.bf16.mxu0 0
    %362 = vmatpush1.bf16.xpose.msra.mxu0 0
    %363 = vmatprep.subr.bf16.mxu0 0
    %364 = vmatpush1.bf16.xpose.msra.mxu0 0
    %365 = vmatprep.subr.bf16.mxu0 0
    %366 = vmatpush1.bf16.xpose.msra.mxu0 0
    %367 = vmatprep.mubr.bf16.mxu0 0
    %368 = vmatmul.mubr.bf16.gmra.mrb[0].mxu0 %v312
    %v369 = vpop.f32.mrb[0].mxu0
    %v370 = vadd.f32 %v273, %v369
    %v371 = vpop.f32.mrb[0].mxu0
    %v372 = vpop.f32.mrb[0].mxu0
    %v373 = vpop.f32.mrb[0].mxu0
    %374 = vdwg.mxu0
    %376 = vrot.lane.b32.xlu0 %v266, 32
    %v377 = vpop.permute.xlu0 %376
    %v379 = vsel %vm78, %v34, %v377
    %v380 = vsub.f32 %v370, %v379
    %v381 = vsub.f32 %v173, %v266
    %v382 = vpack.c.bf16 %v380, %v380
    %v393 = vunpack.c.l.b16 %v61
    %v394 = vunpack.c.l.b16 %v62
    %v395 = vunpack.c.l.b16 %v63
    %v396 = vunpack.c.l.b16 %v64
    %v397 = vunpack.c.l.b16 %v65
    %v398 = vunpack.c.l.b16 %v66
    %v399 = vunpack.c.l.b16 %v67
    %v400 = vunpack.c.l.b16 %v68
    %v401 = vunpack.c.l.b16 %v69
    %v402 = vunpack.c.l.b16 %v70
    %v403 = vpack.c.b16 %v394, %v393
    %v404 = vpack.c.b16 %v396, %v395
    %v405 = vpack.c.b16 %v398, %v397
    %v406 = vpack.c.b16 %v400, %v399
    %v407 = vpack.c.b16 %v402, %v401
    %vm408 = vcmask 916480
    %v410 = vsel %vm408, %v382, 0
    %v413 = vsel %vm408, %v403, 0
    %v416 = vsel %vm408, %v404, 0
    %v419 = vsel %vm408, %v405, 0
    %v422 = vsel %vm408, %v406, 0
    %v425 = vsel %vm408, %v407, 0
    %427 = vmatprep.subr.bf16.mxu0 0
    %428 = vmatpush1.bf16.xpose.msra.mxu0 %v413
    %429 = vmatprep.subr.bf16.mxu0 0
    %430 = vmatpush1.bf16.xpose.msra.mxu0 %v416
    %431 = vmatprep.subr.bf16.mxu0 0
    %432 = vmatpush1.bf16.xpose.msra.mxu0 %v419
    %433 = vmatprep.subr.bf16.mxu0 0
    %434 = vmatpush1.bf16.xpose.msra.mxu0 %v422
    %435 = vmatprep.subr.bf16.mxu0 0
    %436 = vmatpush1.bf16.xpose.msra.mxu0 %v425
    %437 = vmatprep.subr.bf16.mxu0 0
    %438 = vmatpush1.bf16.xpose.msra.mxu0 0
    %439 = vmatprep.subr.bf16.mxu0 0
    %440 = vmatpush1.bf16.xpose.msra.mxu0 0
    %441 = vmatprep.subr.bf16.mxu0 0
    %442 = vmatpush1.bf16.xpose.msra.mxu0 0
    %443 = vmatprep.subr.bf16.mxu0 0
    %444 = vmatpush1.bf16.xpose.msra.mxu0 0
    %445 = vmatprep.subr.bf16.mxu0 0
    %446 = vmatpush1.bf16.xpose.msra.mxu0 0
    %447 = vmatprep.subr.bf16.mxu0 0
    %448 = vmatpush1.bf16.xpose.msra.mxu0 0
    %449 = vmatprep.subr.bf16.mxu0 0
    %450 = vmatpush1.bf16.xpose.msra.mxu0 0
    %451 = vmatprep.subr.bf16.mxu0 0
    %452 = vmatpush1.bf16.xpose.msra.mxu0 0
    %453 = vmatprep.subr.bf16.mxu0 0
    %454 = vmatpush1.bf16.xpose.msra.mxu0 0
    %455 = vmatprep.subr.bf16.mxu0 0
    %456 = vmatpush1.bf16.xpose.msra.mxu0 0
    %457 = vmatprep.subr.bf16.mxu0 0
    %458 = vmatpush1.bf16.xpose.msra.mxu0 0
    %459 = vmatprep.mubr.bf16.mxu0 0
    %460 = vmatmul.mubr.bf16.gmra.mrb[0].mxu0 %v410
    %v461 = vpop.f32.mrb[0].mxu0
    %v462 = vadd.f32 0.0, %v461
    %v463 = vpop.f32.mrb[0].mxu0
    %v464 = vpop.f32.mrb[0].mxu0
    %v465 = vpop.f32.mrb[0].mxu0
    %466 = vdwg.mxu0
    %468 = vrot.lane.b32.xlu0 %v380, 96
    %v469 = vpop.permute.xlu0 %468
    %v471 = vadd.f32 %v381, %v469
    %v472 = vmul.f32 %v471, 0.00390625
    %v473 = vmul.f32 %v380, 0.015625
    %475 = vrot.lane.b32.xlu0 %v473, 96
    %v476 = vpop.permute.xlu0 %475
    %v478 = vsel %vm182, %v472, %v476
    %v479 = vsub.f32 %v462, %v478
    %v480 = vsub.f32 %v266, %v479
    %v481 = vmul.f32 %v381, %v381
    %v482 = vsel %vm182, %v481, 0.0
    %483 = vadd.xlane.f32.xlu0 %v482
    %v484 = vpop.xlane.xlu0 %483
    %v485 = vrot.slane %v484, 4
    %v486 = vadd.f32 %v484, %v485
    %v487 = vrot.slane %v486, 2
    %v488 = vadd.f32 %v486, %v487
    %v489 = vrot.slane %v488, 1
    %v490 = vadd.f32 %v488, %v489
    %s491 = vtos %v490
    %s492 = smul.f32 %s491, 0.001953125
    %v493 = vmul.f32 %v380, %v380
    %v495 = vlaneseq
    %v496 = vshrl.u32 %v495, 7
    %v497 = vsub.s32 0, %v496
    %v498 = vrot.slane %v267, %v497
    %v500 = vmul.f32 %v493, %v498
    %v501 = vsel %vm408, %v500, 0.0
    %502 = vadd.xlane.f32.xlu0 %v501
    %v503 = vpop.xlane.xlu0 %502
    %v504 = vrot.slane %v503, 4
    %v505 = vadd.f32 %v503, %v504
    %v506 = vrot.slane %v505, 2
    %v507 = vadd.f32 %v505, %v506
    %v508 = vrot.slane %v507, 1
    %v509 = vadd.f32 %v507, %v508
    %s510 = vtos %v509
    %s511 = sadd.f32 %s492, %s510
    %p512 = scmp.lt.f32.partialorder %s511, 1e-06
    %s513 = scalar_select %p512, 1, 0
    %s514 = scvt.s32.f32 %s513
    %v515 = vpack.c.bf16 %v480, %v480
    %v517 = vsel %vm310, %v515, 0
    %519 = vmatprep.subr.bf16.mxu0 0
    %520 = vmatpush1.bf16.xpose.msra.mxu0 %v315
    %521 = vmatprep.subr.bf16.mxu0 0
    %522 = vmatpush1.bf16.xpose.msra.mxu0 %v318
    %523 = vmatprep.subr.bf16.mxu0 0
    %524 = vmatpush1.bf16.xpose.msra.mxu0 %v321
    %525 = vmatprep.subr.bf16.mxu0 0
    %526 = vmatpush1.bf16.xpose.msra.mxu0 %v324
    %527 = vmatprep.subr.bf16.mxu0 0
    %528 = vmatpush1.bf16.xpose.msra.mxu0 %v327
    %529 = vmatprep.subr.bf16.mxu0 0
    %530 = vmatpush1.bf16.xpose.msra.mxu0 %v330
    %531 = vmatprep.subr.bf16.mxu0 0
    %532 = vmatpush1.bf16.xpose.msra.mxu0 %v333
    %533 = vmatprep.subr.bf16.mxu0 0
    %534 = vmatpush1.bf16.xpose.msra.mxu0 0
    %535 = vmatprep.subr.bf16.mxu0 0
    %536 = vmatpush1.bf16.xpose.msra.mxu0 0
    %537 = vmatprep.subr.bf16.mxu0 0
    %538 = vmatpush1.bf16.xpose.msra.mxu0 0
    %539 = vmatprep.subr.bf16.mxu0 0
    %540 = vmatpush1.bf16.xpose.msra.mxu0 0
    %541 = vmatprep.subr.bf16.mxu0 0
    %542 = vmatpush1.bf16.xpose.msra.mxu0 0
    %543 = vmatprep.subr.bf16.mxu0 0
    %544 = vmatpush1.bf16.xpose.msra.mxu0 0
    %545 = vmatprep.subr.bf16.mxu0 0
    %546 = vmatpush1.bf16.xpose.msra.mxu0 0
    %547 = vmatprep.subr.bf16.mxu0 0
    %548 = vmatpush1.bf16.xpose.msra.mxu0 0
    %549 = vmatprep.subr.bf16.mxu0 0
    %550 = vmatpush1.bf16.xpose.msra.mxu0 0
    %551 = vmatprep.mubr.bf16.mxu0 0
    %552 = vmatmul.mubr.bf16.gmra.mrb[0].mxu0 %v517
    %v553 = vpop.f32.mrb[0].mxu0
    %v554 = vadd.f32 %v273, %v553
    %v555 = vpop.f32.mrb[0].mxu0
    %v556 = vpop.f32.mrb[0].mxu0
    %v557 = vpop.f32.mrb[0].mxu0
    %558 = vdwg.mxu0
    %560 = vrot.lane.b32.xlu0 %v480, 32
    %v561 = vpop.permute.xlu0 %560
    %v563 = vsel %vm78, %v34, %v561
    %v564 = vsub.f32 %v554, %v563
    %v565 = vsub.f32 %v173, %v480
    %v566 = vpack.c.bf16 %v564, %v564
    %v568 = vsel %vm408, %v566, 0
    %570 = vmatprep.subr.bf16.mxu0 0
    %571 = vmatpush1.bf16.xpose.msra.mxu0 %v413
    %572 = vmatprep.subr.bf16.mxu0 0
    %573 = vmatpush1.bf16.xpose.msra.mxu0 %v416
    %574 = vmatprep.subr.bf16.mxu0 0
    %575 = vmatpush1.bf16.xpose.msra.mxu0 %v419
    %576 = vmatprep.subr.bf16.mxu0 0
    %577 = vmatpush1.bf16.xpose.msra.mxu0 %v422
    %578 = vmatprep.subr.bf16.mxu0 0
    %579 = vmatpush1.bf16.xpose.msra.mxu0 %v425
    %580 = vmatprep.subr.bf16.mxu0 0
    %581 = vmatpush1.bf16.xpose.msra.mxu0 0
    %582 = vmatprep.subr.bf16.mxu0 0
    %583 = vmatpush1.bf16.xpose.msra.mxu0 0
    %584 = vmatprep.subr.bf16.mxu0 0
    %585 = vmatpush1.bf16.xpose.msra.mxu0 0
    %586 = vmatprep.subr.bf16.mxu0 0
    %587 = vmatpush1.bf16.xpose.msra.mxu0 0
    %588 = vmatprep.subr.bf16.mxu0 0
    %589 = vmatpush1.bf16.xpose.msra.mxu0 0
    %590 = vmatprep.subr.bf16.mxu0 0
    %591 = vmatpush1.bf16.xpose.msra.mxu0 0
    %592 = vmatprep.subr.bf16.mxu0 0
    %593 = vmatpush1.bf16.xpose.msra.mxu0 0
    %594 = vmatprep.subr.bf16.mxu0 0
    %595 = vmatpush1.bf16.xpose.msra.mxu0 0
    %596 = vmatprep.subr.bf16.mxu0 0
    %597 = vmatpush1.bf16.xpose.msra.mxu0 0
    %598 = vmatprep.subr.bf16.mxu0 0
    %599 = vmatpush1.bf16.xpose.msra.mxu0 0
    %600 = vmatprep.subr.bf16.mxu0 0
    %601 = vmatpush1.bf16.xpose.msra.mxu0 0
    %602 = vmatprep.mubr.bf16.mxu0 0
    %603 = vmatmul.mubr.bf16.gmra.mrb[0].mxu0 %v568
    %v604 = vpop.f32.mrb[0].mxu0
    %v605 = vadd.f32 0.0, %v604
    %v606 = vpop.f32.mrb[0].mxu0
    %v607 = vpop.f32.mrb[0].mxu0
    %v608 = vpop.f32.mrb[0].mxu0
    %609 = vdwg.mxu0
    %611 = vrot.lane.b32.xlu0 %v564, 96
    %v612 = vpop.permute.xlu0 %611
    %v614 = vadd.f32 %v565, %v612
    %v615 = vmul.f32 %v614, 0.00390625
    %v616 = vmul.f32 %v564, 0.015625
    %618 = vrot.lane.b32.xlu0 %v616, 96
    %v619 = vpop.permute.xlu0 %618
    %v621 = vsel %vm182, %v615, %v619
    %v622 = vsub.f32 %v605, %v621
    %s623 = ssub.f32 1.0, %s514
    %v624 = vstv %s623
    %v625 = vmul.f32 %v624, %v622
    %v626 = vsub.f32 %v480, %v625
    %v627 = vmul.f32 %v565, %v565
    %v628 = vsel %vm182, %v627, 0.0
    %629 = vadd.xlane.f32.xlu0 %v628
    %v630 = vpop.xlane.xlu0 %629
    %v631 = vrot.slane %v630, 4
    %v632 = vadd.f32 %v630, %v631
    %v633 = vrot.slane %v632, 2
    %v634 = vadd.f32 %v632, %v633
    %v635 = vrot.slane %v634, 1
    %v636 = vadd.f32 %v634, %v635
    %s637 = vtos %v636
    %s638 = smul.f32 %s637, 0.001953125
    %v639 = vmul.f32 %v564, %v564
    %v640 = vmul.f32 %v639, %v498
    %v641 = vsel %vm408, %v640, 0.0
    %642 = vadd.xlane.f32.xlu0 %v641
    %v643 = vpop.xlane.xlu0 %642
    %v644 = vrot.slane %v643, 4
    %v645 = vadd.f32 %v643, %v644
    %v646 = vrot.slane %v645, 2
    %v647 = vadd.f32 %v645, %v646
    %v648 = vrot.slane %v647, 1
    %v649 = vadd.f32 %v647, %v648
    %s650 = vtos %v649
    %s651 = sadd.f32 %s638, %s650
    %p652 = scmp.lt.f32.partialorder %s651, 1e-06
    %s653 = scalar_select %p652, 1, 0
    %s654 = scvt.s32.f32 %s653
    %s655 = smax.f32 %s514, %s654
    %v656 = vpack.c.bf16 %v626, %v626
    %v658 = vsel %vm310, %v656, 0
    %660 = vmatprep.subr.bf16.mxu0 0
    %661 = vmatpush1.bf16.xpose.msra.mxu0 %v315
    %662 = vmatprep.subr.bf16.mxu0 0
    %663 = vmatpush1.bf16.xpose.msra.mxu0 %v318
    %664 = vmatprep.subr.bf16.mxu0 0
    %665 = vmatpush1.bf16.xpose.msra.mxu0 %v321
    %666 = vmatprep.subr.bf16.mxu0 0
    %667 = vmatpush1.bf16.xpose.msra.mxu0 %v324
    %668 = vmatprep.subr.bf16.mxu0 0
    %669 = vmatpush1.bf16.xpose.msra.mxu0 %v327
    %670 = vmatprep.subr.bf16.mxu0 0
    %671 = vmatpush1.bf16.xpose.msra.mxu0 %v330
    %672 = vmatprep.subr.bf16.mxu0 0
    %673 = vmatpush1.bf16.xpose.msra.mxu0 %v333
    %674 = vmatprep.subr.bf16.mxu0 0
    %675 = vmatpush1.bf16.xpose.msra.mxu0 0
    %676 = vmatprep.subr.bf16.mxu0 0
    %677 = vmatpush1.bf16.xpose.msra.mxu0 0
    %678 = vmatprep.subr.bf16.mxu0 0
    %679 = vmatpush1.bf16.xpose.msra.mxu0 0
    %680 = vmatprep.subr.bf16.mxu0 0
    %681 = vmatpush1.bf16.xpose.msra.mxu0 0
    %682 = vmatprep.subr.bf16.mxu0 0
    %683 = vmatpush1.bf16.xpose.msra.mxu0 0
    %684 = vmatprep.subr.bf16.mxu0 0
    %685 = vmatpush1.bf16.xpose.msra.mxu0 0
    %686 = vmatprep.subr.bf16.mxu0 0
    %687 = vmatpush1.bf16.xpose.msra.mxu0 0
    %688 = vmatprep.subr.bf16.mxu0 0
    %689 = vmatpush1.bf16.xpose.msra.mxu0 0
    %690 = vmatprep.subr.bf16.mxu0 0
    %691 = vmatpush1.bf16.xpose.msra.mxu0 0
    %692 = vmatprep.mubr.bf16.mxu0 0
    %693 = vmatmul.mubr.bf16.gmra.mrb[0].mxu0 %v658
    %v694 = vpop.f32.mrb[0].mxu0
    %v695 = vadd.f32 %v273, %v694
    %v696 = vpop.f32.mrb[0].mxu0
    %v697 = vpop.f32.mrb[0].mxu0
    %v698 = vpop.f32.mrb[0].mxu0
    %699 = vdwg.mxu0
    %701 = vrot.lane.b32.xlu0 %v626, 32
    %v702 = vpop.permute.xlu0 %701
    %v704 = vsel %vm78, %v34, %v702
    %v705 = vsub.f32 %v695, %v704
    %v706 = vsub.f32 %v173, %v626
    %v707 = vpack.c.bf16 %v705, %v705
    %v709 = vsel %vm408, %v707, 0
    %711 = vmatprep.subr.bf16.mxu0 0
    %712 = vmatpush1.bf16.xpose.msra.mxu0 %v413
    %713 = vmatprep.subr.bf16.mxu0 0
    %714 = vmatpush1.bf16.xpose.msra.mxu0 %v416
    %715 = vmatprep.subr.bf16.mxu0 0
    %716 = vmatpush1.bf16.xpose.msra.mxu0 %v419
    %717 = vmatprep.subr.bf16.mxu0 0
    %718 = vmatpush1.bf16.xpose.msra.mxu0 %v422
    %719 = vmatprep.subr.bf16.mxu0 0
    %720 = vmatpush1.bf16.xpose.msra.mxu0 %v425
    %721 = vmatprep.subr.bf16.mxu0 0
    %722 = vmatpush1.bf16.xpose.msra.mxu0 0
    %723 = vmatprep.subr.bf16.mxu0 0
    %724 = vmatpush1.bf16.xpose.msra.mxu0 0
    %725 = vmatprep.subr.bf16.mxu0 0
    %726 = vmatpush1.bf16.xpose.msra.mxu0 0
    %727 = vmatprep.subr.bf16.mxu0 0
    %728 = vmatpush1.bf16.xpose.msra.mxu0 0
    %729 = vmatprep.subr.bf16.mxu0 0
    %730 = vmatpush1.bf16.xpose.msra.mxu0 0
    %731 = vmatprep.subr.bf16.mxu0 0
    %732 = vmatpush1.bf16.xpose.msra.mxu0 0
    %733 = vmatprep.subr.bf16.mxu0 0
    %734 = vmatpush1.bf16.xpose.msra.mxu0 0
    %735 = vmatprep.subr.bf16.mxu0 0
    %736 = vmatpush1.bf16.xpose.msra.mxu0 0
    %737 = vmatprep.subr.bf16.mxu0 0
    %738 = vmatpush1.bf16.xpose.msra.mxu0 0
    %739 = vmatprep.subr.bf16.mxu0 0
    %740 = vmatpush1.bf16.xpose.msra.mxu0 0
    %741 = vmatprep.subr.bf16.mxu0 0
    %742 = vmatpush1.bf16.xpose.msra.mxu0 0
    %743 = vmatprep.mubr.bf16.mxu0 0
    %744 = vmatmul.mubr.bf16.gmra.mrb[0].mxu0 %v709
    %v745 = vpop.f32.mrb[0].mxu0
    %v746 = vadd.f32 0.0, %v745
    %v747 = vpop.f32.mrb[0].mxu0
    %v748 = vpop.f32.mrb[0].mxu0
    %v749 = vpop.f32.mrb[0].mxu0
    %750 = vdwg.mxu0
    %752 = vrot.lane.b32.xlu0 %v705, 96
    %v753 = vpop.permute.xlu0 %752
    %v755 = vadd.f32 %v706, %v753
    %v756 = vmul.f32 %v755, 0.00390625
    %v757 = vmul.f32 %v705, 0.015625
    %759 = vrot.lane.b32.xlu0 %v757, 96
    %v760 = vpop.permute.xlu0 %759
    %v762 = vsel %vm182, %v756, %v760
    %v763 = vsub.f32 %v746, %v762
    %s764 = ssub.f32 1.0, %s655
    %v765 = vstv %s764
    %v766 = vmul.f32 %v765, %v763
    %v767 = vsub.f32 %v626, %v766
    %769 = vrot.lane.b32.xlu0 %v767, 64
    %v770 = vpop.permute.xlu0 %769
    %vm772 = vcmask 130048
    %773 = vst.msk [vmem:[#allocation2] sm:$0xff] %vm772, %v770
    // Predicated region
    $region38: #{tpu_custom_call.1} parent=1 // pred_check
      _
    $region39: #{tpu_custom_call.1} parent=1 // pred_check_branch
      %775 = sbr.rel (0) target = $region41
    $region40: #{tpu_custom_call.1} parent=1 // pred_region
      %s777 = ssub.s32 128, 128
      %778 = vsyncadd [#allocation3], %s777
      %s780 = sshll.u32 [#allocation2], 4
      %s781 = int_to_ptr.vmem [resolvable:$true] %s780
      %783 = dma.vmem_to_hbm [thread:$0]  %s781, 128, %s9, [#allocation3]
    $region41: #{tpu_custom_call.1} parent=1 // pred_fallthru
      _
    // Predicated region
    $region42: #{tpu_custom_call.1} parent=1 // pred_check
      _
    $region43: #{tpu_custom_call.1} parent=1 // pred_check_branch
      %785 = sbr.rel (0) target = $region45
    $region44: #{tpu_custom_call.1} parent=1 // pred_region
      %786 = dma.done [#allocation3], 128
    $region45: #{tpu_custom_call.1} parent=1 // pred_fallthru
      _
    %787 = vsyncpa [#allocation3], 1

</llo_original>
